<compile_context>
chip_gen: v6e
topology: v6e:2x2x1
jax: 0.10.0
libtpu: 0.0.40
codegen_flags: <defaults>
</compile_context>

<pallas_src>
import math

import jax
import jax.numpy as jnp
from jax.experimental import pallas as pl
from jax.experimental.pallas import tpu as pltpu


def _scalable_gate_kernel(e_ref, t_ref,
                          wse_ref, wst_ref, bse_ref, bst_ref,
                          wge_ref, wgt_ref, bg_ref,
                          o_ref):
    e = e_ref[...]                      # native dtype straight into the MXU
    t = t_ref[...]

    # Scaling linears (f32 accumulation on the MXU).
    e_s = (jnp.dot(e, wse_ref[...], preferred_element_type=jnp.float32)
           + bse_ref[...].astype(jnp.float32))
    t_s = (jnp.dot(t, wst_ref[...], preferred_element_type=jnp.float32)
           + bst_ref[...].astype(jnp.float32))

    # Gate logits: cat(e_s, t_s) @ Wg.T + bg
    #            == e_s @ Wg[:, :D].T + t_s @ Wg[:, D:].T + bg
    wdt = wge_ref.dtype
    logits = (jnp.dot(e_s.astype(wdt), wge_ref[...],
                      preferred_element_type=jnp.float32)
              + jnp.dot(t_s.astype(wdt), wgt_ref[...],
                        preferred_element_type=jnp.float32)
              + bg_ref[...].astype(jnp.float32))

    g = jax.nn.sigmoid(logits)          # transcendental -> EUP slot
    out = t_s + g * (e_s - t_s)         # one fewer VPU mul than g*e + (1-g)*t
    o_ref[...] = out.astype(o_ref.dtype)


def prepare_params(w_ent, b_ent, w_trg, b_trg, w_gate, b_gate, *, param_dtype=None):
    """One-time parameter layout prep (hoisted out of the per-call path).

    PyTorch nn.Linear convention: weights are [out_features, in_features],
    y = x @ W.T + b.  Optionally cast weights to `param_dtype` (e.g. bf16).
    """
    out_dim, embed_dim = w_ent.shape
    assert w_trg.shape == (out_dim, embed_dim)
    assert w_gate.shape == (out_dim, 2 * out_dim)

    cast = (lambda x: x.astype(param_dtype)) if param_dtype is not None else (lambda x: x)
    wg_t = w_gate.T                             # [2*out_dim, out_dim]
    return dict(
        wse=cast(w_ent.T),                      # [embed_dim, out_dim]
        wst=cast(w_trg.T),                      # [embed_dim, out_dim]
        bse=b_ent.reshape(1, out_dim).astype(jnp.float32),
        bst=b_trg.reshape(1, out_dim).astype(jnp.float32),
        wge=cast(wg_t[:out_dim, :]),            # gate half applied to scaled entity
        wgt=cast(wg_t[out_dim:, :]),            # gate half applied to scaled trigger
        bg=b_gate.reshape(1, out_dim).astype(jnp.float32),
    )


def _round_up(x, m):
    return (x + m - 1) // m * m


def _pick_row_tile(n_rows, embed_dim, out_dim, act_itemsize, out_itemsize):
    # Big row tiles (~512 f32 / ~1024 bf16) approach the HBM roofline;
    # bound by a VMEM stream budget that leaves headroom for the resident
    # weights and fits the smallest generation (v7x: 64 MiB phys / 32 scoped).
    target = 512 if act_itemsize >= 4 else 1024
    stream_budget = 12 * 1024 * 1024
    per_row = 2 * (2 * embed_dim * act_itemsize + out_dim * out_itemsize)  # x2 double-buffer
    tile = max(8, min(target, stream_budget // max(per_row, 1)))
    tile = (tile // 8) * 8
    return int(min(tile, _round_up(n_rows, 8)))


def scalable_gate_forward(entity, trigger, params, *, row_tile=None):
    """Pallas-backed ScalableGate forward.

    entity, trigger : [..., embed_dim]
    params          : dict from prepare_params()
    """
    assert entity.shape == trigger.shape
    embed_dim = entity.shape[-1]
    out_dim = params["wse"].shape[-1]
    assert params["wse"].shape == (embed_dim, out_dim)

    lead_shape = entity.shape[:-1]
    n_rows = math.prod(lead_shape) if lead_shape else 1
    e2 = entity.reshape(n_rows, embed_dim)
    t2 = trigger.reshape(n_rows, embed_dim)

    out_dtype = entity.dtype
    act_itemsize = e2.dtype.itemsize
    out_itemsize = jnp.dtype(out_dtype).itemsize
    if row_tile is None:
        row_tile = _pick_row_tile(n_rows, embed_dim, out_dim, act_itemsize, out_itemsize)
    grid = (pl.cdiv(n_rows, row_tile),)   # trailing partial tile is masked by Pallas

    w_bytes = sum(int(params[k].size) * params[k].dtype.itemsize
                  for k in ("wse", "wst", "wge", "wgt", "bse", "bst", "bg"))
    stream_bytes = 2 * row_tile * (2 * embed_dim * act_itemsize + out_dim * out_itemsize)
    vmem_limit = int(min(max(2 * w_bytes + 2 * stream_bytes + (4 << 20), 16 << 20), 64 << 20))

    cost = pl.CostEstimate(
        flops=(4 * n_rows * embed_dim * out_dim          # two scaling matmuls
               + 4 * n_rows * out_dim * out_dim          # two gate matmuls
               + 6 * n_rows * out_dim),                  # bias + blend elementwise
        transcendentals=n_rows * out_dim,                # sigmoid
        bytes_accessed=(n_rows * (2 * embed_dim * act_itemsize + out_dim * out_itemsize)
                        + w_bytes),
    )

    out = pl.pallas_call(
        _scalable_gate_kernel,
        out_shape=jax.ShapeDtypeStruct((n_rows, out_dim), out_dtype),
        grid_spec=pltpu.PrefetchScalarGridSpec(
            num_scalar_prefetch=0,
            grid=grid,
            in_specs=[
                pl.BlockSpec((row_tile, embed_dim), lambda i: (i, 0)),  # entity rows
                pl.BlockSpec((row_tile, embed_dim), lambda i: (i, 0)),  # trigger rows
                pl.BlockSpec((embed_dim, out_dim), lambda i: (0, 0)),   # Wse (resident)
                pl.BlockSpec((embed_dim, out_dim), lambda i: (0, 0)),   # Wst (resident)
                pl.BlockSpec((1, out_dim), lambda i: (0, 0)),           # bse
                pl.BlockSpec((1, out_dim), lambda i: (0, 0)),           # bst
                pl.BlockSpec((out_dim, out_dim), lambda i: (0, 0)),     # Wge (resident)
                pl.BlockSpec((out_dim, out_dim), lambda i: (0, 0)),     # Wgt (resident)
                pl.BlockSpec((1, out_dim), lambda i: (0, 0)),           # bg
            ],
            out_specs=pl.BlockSpec((row_tile, out_dim), lambda i: (i, 0)),
        ),
        compiler_params=pltpu.CompilerParams(
            dimension_semantics=("parallel",),   # rows shard across v7x's 2 TCs
            vmem_limit_bytes=vmem_limit,
        ),
        cost_estimate=cost,
    )(e2, t2,
      params["wse"], params["wst"], params["bse"], params["bst"],
      params["wge"], params["wgt"], params["bg"])

    return out.reshape(*lead_shape, out_dim)


def _reference(entity, trigger, w_ent, b_ent, w_trg, b_trg, w_gate, b_gate):
    e = entity @ w_ent.T + b_ent
    t = trigger @ w_trg.T + b_trg
    h = jnp.concatenate([e, t], axis=-1)
    g = jax.nn.sigmoid(h @ w_gate.T + b_gate)
    return g * e + (1.0 - g) * t


if __name__ == "__main__":
    key = jax.random.PRNGKey(0)
    k_e, k_t, k_we, k_wt, k_wg, k_be, k_bt = jax.random.split(key, 7)

    batch, seq, embed_dim, out_dim = 2, 8, 32, 32

    entity = jax.random.normal(k_e, (batch, seq, embed_dim), dtype=jnp.float32)
    trigger = jax.random.normal(k_t, (batch, seq, embed_dim), dtype=jnp.float32)

    # Deterministic parameter init (PyTorch nn.Linear convention: [out, in]).
    def xavier(k, shape):
        fan_out, fan_in = shape
        std = (2.0 / (fan_in + fan_out)) ** 0.5
        return std * jax.random.normal(k, shape, dtype=jnp.float32)

    w_ent = xavier(k_we, (out_dim, embed_dim))
    b_ent = 0.01 * jax.random.normal(k_be, (out_dim,), dtype=jnp.float32)
    w_trg = xavier(k_wt, (out_dim, embed_dim))
    b_trg = 0.01 * jax.random.normal(k_bt, (out_dim,), dtype=jnp.float32)
    w_gate = xavier(k_wg, (out_dim, 2 * out_dim))   # Gate._init_linear: xavier_normal_
    b_gate = jnp.zeros((out_dim,), dtype=jnp.float32)   # Gate._init_linear: bias = 0

    # One-time parameter layout prep (hoisted out of the per-call path).
    params = prepare_params(w_ent, b_ent, w_trg, b_trg, w_gate, b_gate)

    # row_tile=8 forces a multi-step grid even at this tiny demo size so the
    # pipelined / megacore path is exercised; production uses the auto tile.
    out = scalable_gate_forward(entity, trigger, params, row_tile=8)
    out = jax.block_until_ready(out)

    ref = _reference(entity, trigger, w_ent, b_ent, w_trg, b_trg, w_gate, b_gate)
    assert out.shape == ref.shape
    assert jnp.allclose(out, ref, atol=1e-5, rtol=1e-5), (
        f"max abs err = {jnp.max(jnp.abs(out - ref))}"
    )
    print("KERNEL_OK")
</pallas_src>

<mosaic_0001>
module attributes {stable_mosaic.version = 11 : i64} {
  func.func @_scalable_gate_kernel(%arg0: i32, %arg1: memref<8x32xf32, #tpu.memory_space<vmem>>, %arg2: memref<8x32xf32, #tpu.memory_space<vmem>>, %arg3: memref<32x32xf32, #tpu.memory_space<vmem>>, %arg4: memref<32x32xf32, #tpu.memory_space<vmem>>, %arg5: memref<1x32xf32, #tpu.memory_space<vmem>>, %arg6: memref<1x32xf32, #tpu.memory_space<vmem>>, %arg7: memref<32x32xf32, #tpu.memory_space<vmem>>, %arg8: memref<32x32xf32, #tpu.memory_space<vmem>>, %arg9: memref<1x32xf32, #tpu.memory_space<vmem>>, %arg10: memref<8x32xf32, #tpu.memory_space<vmem>>) attributes {dimension_semantics = [#tpu.dimension_semantics<parallel>], iteration_bounds = array<i64: 2>, scalar_prefetch = 0 : i64, scratch_operands = 0 : i64, tpu.core_type = #tpu.core_type<tc>, window_params = [{transform_indices = @transform_0, window_bounds = array<i64: 8, 32>}, {transform_indices = @transform_1, window_bounds = array<i64: 8, 32>}, {pipeline_mode = #tpu.pipeline_mode<synchronous>, transform_indices = @transform_2, window_bounds = array<i64: 32, 32>}, {pipeline_mode = #tpu.pipeline_mode<synchronous>, transform_indices = @transform_3, window_bounds = array<i64: 32, 32>}, {pipeline_mode = #tpu.pipeline_mode<synchronous>, transform_indices = @transform_4, window_bounds = array<i64: 1, 32>}, {pipeline_mode = #tpu.pipeline_mode<synchronous>, transform_indices = @transform_5, window_bounds = array<i64: 1, 32>}, {pipeline_mode = #tpu.pipeline_mode<synchronous>, transform_indices = @transform_6, window_bounds = array<i64: 32, 32>}, {pipeline_mode = #tpu.pipeline_mode<synchronous>, transform_indices = @transform_7, window_bounds = array<i64: 32, 32>}, {pipeline_mode = #tpu.pipeline_mode<synchronous>, transform_indices = @transform_8, window_bounds = array<i64: 1, 32>}, {transform_indices = @transform_9, window_bounds = array<i64: 8, 32>}]} {
    %c0 = arith.constant 0 : index
    %c0_0 = arith.constant 0 : index
    %0 = vector.load %arg1[%c0, %c0_0] : memref<8x32xf32, #tpu.memory_space<vmem>>, vector<8x32xf32>
    %c0_1 = arith.constant 0 : index
    %c0_2 = arith.constant 0 : index
    %1 = vector.load %arg2[%c0_1, %c0_2] : memref<8x32xf32, #tpu.memory_space<vmem>>, vector<8x32xf32>
    %c0_3 = arith.constant 0 : index
    %c0_4 = arith.constant 0 : index
    %2 = vector.load %arg3[%c0_3, %c0_4] : memref<32x32xf32, #tpu.memory_space<vmem>>, vector<32x32xf32>
    %cst = arith.constant dense<0.000000e+00> : vector<8x32xf32>
    %3 = tpu.matmul %0, %2, %cst {dimension_numbers = #tpu.dot_dimension_numbers<[1], [0], [0], [1], [0, 0, 1, 1], [], []>} : vector<8x32xf32>, vector<32x32xf32>, vector<8x32xf32> -> vector<8x32xf32>
    %c0_5 = arith.constant 0 : index
    %c0_6 = arith.constant 0 : index
    %4 = vector.load %arg5[%c0_5, %c0_6] : memref<1x32xf32, #tpu.memory_space<vmem>>, vector<1x32xf32>
    %5 = vector.broadcast %4 : vector<1x32xf32> to vector<8x32xf32>
    %6 = arith.addf %3, %5 : vector<8x32xf32>
    %c0_7 = arith.constant 0 : index
    %c0_8 = arith.constant 0 : index
    %7 = vector.load %arg4[%c0_7, %c0_8] : memref<32x32xf32, #tpu.memory_space<vmem>>, vector<32x32xf32>
    %cst_9 = arith.constant dense<0.000000e+00> : vector<8x32xf32>
    %8 = tpu.matmul %1, %7, %cst_9 {dimension_numbers = #tpu.dot_dimension_numbers<[1], [0], [0], [1], [0, 0, 1, 1], [], []>} : vector<8x32xf32>, vector<32x32xf32>, vector<8x32xf32> -> vector<8x32xf32>
    %c0_10 = arith.constant 0 : index
    %c0_11 = arith.constant 0 : index
    %9 = vector.load %arg6[%c0_10, %c0_11] : memref<1x32xf32, #tpu.memory_space<vmem>>, vector<1x32xf32>
    %10 = vector.broadcast %9 : vector<1x32xf32> to vector<8x32xf32>
    %11 = arith.addf %8, %10 : vector<8x32xf32>
    %c0_12 = arith.constant 0 : index
    %c0_13 = arith.constant 0 : index
    %12 = vector.load %arg7[%c0_12, %c0_13] : memref<32x32xf32, #tpu.memory_space<vmem>>, vector<32x32xf32>
    %cst_14 = arith.constant dense<0.000000e+00> : vector<8x32xf32>
    %13 = tpu.matmul %6, %12, %cst_14 {dimension_numbers = #tpu.dot_dimension_numbers<[1], [0], [0], [1], [0, 0, 1, 1], [], []>} : vector<8x32xf32>, vector<32x32xf32>, vector<8x32xf32> -> vector<8x32xf32>
    %c0_15 = arith.constant 0 : index
    %c0_16 = arith.constant 0 : index
    %14 = vector.load %arg8[%c0_15, %c0_16] : memref<32x32xf32, #tpu.memory_space<vmem>>, vector<32x32xf32>
    %cst_17 = arith.constant dense<0.000000e+00> : vector<8x32xf32>
    %15 = tpu.matmul %11, %14, %cst_17 {dimension_numbers = #tpu.dot_dimension_numbers<[1], [0], [0], [1], [0, 0, 1, 1], [], []>} : vector<8x32xf32>, vector<32x32xf32>, vector<8x32xf32> -> vector<8x32xf32>
    %16 = arith.addf %13, %15 : vector<8x32xf32>
    %c0_18 = arith.constant 0 : index
    %c0_19 = arith.constant 0 : index
    %17 = vector.load %arg9[%c0_18, %c0_19] : memref<1x32xf32, #tpu.memory_space<vmem>>, vector<1x32xf32>
    %18 = vector.broadcast %17 : vector<1x32xf32> to vector<8x32xf32>
    %19 = arith.addf %16, %18 : vector<8x32xf32>
    %20 = arith.negf %19 : vector<8x32xf32>
    %21 = math.exp %20 : vector<8x32xf32>
    %cst_20 = arith.constant 1.000000e+00 : f32
    %22 = vector.broadcast %cst_20 : f32 to vector<8x32xf32>
    %23 = arith.addf %22, %21 : vector<8x32xf32>
    %24 = arith.divf %22, %23 : vector<8x32xf32>
    %25 = arith.subf %6, %11 : vector<8x32xf32>
    %26 = arith.mulf %24, %25 : vector<8x32xf32>
    %27 = arith.addf %11, %26 : vector<8x32xf32>
    %c0_21 = arith.constant 0 : index
    %c0_22 = arith.constant 0 : index
    %28 = vector.load %arg10[%c0_21, %c0_22] : memref<8x32xf32, #tpu.memory_space<vmem>>, vector<8x32xf32>
    tpu.vector_store %arg10[%c0_21, %c0_22], %27 {strides = array<i32>} : memref<8x32xf32, #tpu.memory_space<vmem>>, vector<8x32xf32>,
    return
  }
  func.func @transform_0(%arg0: i32) -> (i32, i32) {
    %c0_i32 = arith.constant 0 : i32
    %c0_i32_0 = arith.constant 0 : i32
    return %arg0, %c0_i32 : i32, i32
  }
  func.func @transform_1(%arg0: i32) -> (i32, i32) {
    %c0_i32 = arith.constant 0 : i32
    %c0_i32_0 = arith.constant 0 : i32
    return %arg0, %c0_i32 : i32, i32
  }
  func.func @transform_2(%arg0: i32) -> (i32, i32) {
    %c0_i32 = arith.constant 0 : i32
    %c0_i32_0 = arith.constant 0 : i32
    %c0_i32_1 = arith.constant 0 : i32
    return %c0_i32, %c0_i32_0 : i32, i32
  }
  func.func @transform_3(%arg0: i32) -> (i32, i32) {
    %c0_i32 = arith.constant 0 : i32
    %c0_i32_0 = arith.constant 0 : i32
    %c0_i32_1 = arith.constant 0 : i32
    return %c0_i32, %c0_i32_0 : i32, i32
  }
  func.func @transform_4(%arg0: i32) -> (i32, i32) {
    %c0_i32 = arith.constant 0 : i32
    %c0_i32_0 = arith.constant 0 : i32
    %c0_i32_1 = arith.constant 0 : i32
    return %c0_i32, %c0_i32_0 : i32, i32
  }
  func.func @transform_5(%arg0: i32) -> (i32, i32) {
    %c0_i32 = arith.constant 0 : i32
    %c0_i32_0 = arith.constant 0 : i32
    %c0_i32_1 = arith.constant 0 : i32
    return %c0_i32, %c0_i32_0 : i32, i32
  }
  func.func @transform_6(%arg0: i32) -> (i32, i32) {
    %c0_i32 = arith.constant 0 : i32
    %c0_i32_0 = arith.constant 0 : i32
    %c0_i32_1 = arith.constant 0 : i32
    return %c0_i32, %c0_i32_0 : i32, i32
  }
  func.func @transform_7(%arg0: i32) -> (i32, i32) {
    %c0_i32 = arith.constant 0 : i32
    %c0_i32_0 = arith.constant 0 : i32
    %c0_i32_1 = arith.constant 0 : i32
    return %c0_i32, %c0_i32_0 : i32, i32
  }
  func.func @transform_8(%arg0: i32) -> (i32, i32) {
    %c0_i32 = arith.constant 0 : i32
    %c0_i32_0 = arith.constant 0 : i32
    %c0_i32_1 = arith.constant 0 : i32
    return %c0_i32, %c0_i32_0 : i32, i32
  }
  func.func @transform_9(%arg0: i32) -> (i32, i32) {
    %c0_i32 = arith.constant 0 : i32
    %c0_i32_0 = arith.constant 0 : i32
    return %arg0, %c0_i32 : i32, i32
  }
}

</mosaic_0001>

<llo_original>
// kernel: tpu_custom_call.1
$region0: #{tpu_custom_call.1}
  #allocation0 [shape = 'u32[]', space=smem, size = 0x4, offset = 0x4, fixed_abs, tag = 'smem constant byte address 0x4 - core index']
  #allocation1 [shape = 'u32[144,128]{1,0:T(1,128)}', space=vmem, size = 0x12000, scoped, tag = 'internal scratch']
  %s0 = inlined_call_operand.hbm [shape: f32[16,32], index: 0, kind: input, shape index: {}]
  %s1 = inlined_call_operand.hbm [shape: f32[16,32], index: 1, kind: input, shape index: {}]
  %s2 = inlined_call_operand.hbm [shape: f32[32,32], index: 2, kind: input, shape index: {}]
  %s3 = inlined_call_operand.hbm [shape: f32[32,32], index: 3, kind: input, shape index: {}]
  %s4 = inlined_call_operand.vmem [shape: f32[1,32], index: 4, kind: input, shape index: {}]
  %s5 = inlined_call_operand.vmem [shape: f32[1,32], index: 5, kind: input, shape index: {}]
  %s6 = inlined_call_operand.hbm [shape: f32[32,32], index: 6, kind: input, shape index: {}]
  %s7 = inlined_call_operand.hbm [shape: f32[32,32], index: 7, kind: input, shape index: {}]
  %s8 = inlined_call_operand.vmem [shape: f32[1,32], index: 8, kind: input, shape index: {}]
  %s9 = inlined_call_operand.hbm [shape: f32[16,32], index: 9, kind: output, shape index: {}]
  %s10 = sld [smem:[#allocation0]]
  $region93: #{tpu_custom_call.1} parent=0
    _
  %s12 = ssub.s32 1, %s10
  %s13 = scalar_select 0, %s12, %s10
  $region1: #{tpu_custom_call.1} parent=0
    #allocation2 [shape = 'u8[8192]{0}', space=vmem, size = 0x2000, scoped, tag = 'input window, operand 0']
    #allocation3 [shape = 's32[2]{0}', space=sflag, size = 0x8, scoped, tag = 'scoped memory for tpu_custom_call.1']
    #allocation4 [shape = 's32[2]{0}', space=sflag, size = 0x8, scoped, tag = 'scoped memory for tpu_custom_call.1']
    #allocation5 [shape = 'u8[8192]{0}', space=vmem, size = 0x2000, scoped, tag = 'input window, operand 1']
    #allocation6 [shape = 's32[2]{0}', space=sflag, size = 0x8, scoped, tag = 'scoped memory for tpu_custom_call.1']
    #allocation7 [shape = 'u8[16384]{0}', space=vmem, size = 0x4000, scoped, tag = 'input window, operand 2, single buffered']
    #allocation8 [shape = 'u8[16384]{0}', space=vmem, size = 0x4000, scoped, tag = 'input window, operand 3, single buffered']
    #allocation9 [shape = 's32[1]{0}', space=sflag, size = 0x4, scoped, tag = 'scoped memory for tpu_custom_call.1']
    #allocation10 [shape = 'u8[16384]{0}', space=vmem, size = 0x4000, scoped, tag = 'input window, operand 6, single buffered']
    #allocation11 [shape = 'u8[16384]{0}', space=vmem, size = 0x4000, scoped, tag = 'input window, operand 7, single buffered']
    #allocation12 [shape = 's32[1]{0}', space=sflag, size = 0x4, scoped, tag = 'scoped memory for tpu_custom_call.1']
    #allocation13 [shape = 'u8[8192]{0}', space=vmem, size = 0x2000, scoped, tag = 'output window, operand 0']
    %14 = vsyncpa [#allocation3], 0
    %s15 = scalar_lea.sflag [#allocation3], 1
    %16 = vsyncpa %s15, 0
    %17 = vsyncpa [#allocation6], 0
    %s18 = scalar_lea.sflag [#allocation6], 1
    %19 = vsyncpa %s18, 0
    %20 = vsyncpa [#allocation9], 0
    %21 = vsyncpa [#allocation12], 0
    %22 = vsyncpa [#allocation4], 0
    %s23 = scalar_lea.sflag [#allocation4], 1
    %24 = vsyncpa %s23, 0
    loop: start=0, step=1, limit=4
    $region2: #{tpu_custom_call.1} parent=1 // loop_pre_header
      _
    $region3: #{tpu_custom_call.1} parent=1 // loop_header
      %s26 = sphi 0, %s30
      %p27 = scmp.ge.s32.totalorder %s26, 4
      %s36 = sphi 0, %s38
      %s39 = sphi 0, %s36
      %s40 = sphi 0, %s39
      %s56 = sphi 0, %s40
      %s62 = sphi 0, %s64
      %s65 = sphi 0, %s62
      %s66 = sphi 0, %s65
      %s82 = sphi 0, %s66
      %s86 = sphi 0, %s86
      %s88 = sphi 0, %s86
      %s89 = sphi 0, %s88
      %s103 = sphi 0, %s89
      %s107 = sphi 0, %s107
      %s109 = sphi 0, %s107
      %s110 = sphi 0, %s109
      %s124 = sphi 0, %s110
      %s128 = sphi 0, %s128
      %s130 = sphi 0, %s128
      %s131 = sphi 0, %s130
      %s145 = sphi 0, %s131
      %s149 = sphi 0, %s149
      %s151 = sphi 0, %s149
      %s152 = sphi 0, %s151
      %s166 = sphi 0, %s152
      %s170 = sphi 0, %s170
      %s172 = sphi 0, %s170
      %s173 = sphi 0, %s172
      %s187 = sphi 0, %s173
      %s191 = sphi 0, %s191
      %s193 = sphi 0, %s191
      %s194 = sphi 0, %s193
      %s208 = sphi 0, %s194
      %s212 = sphi 0, %s212
      %s214 = sphi 0, %s212
      %s215 = sphi 0, %s214
      %s229 = sphi 0, %s215
      %s235 = sphi 0, %s237
      %s238 = sphi 0, %s235
      %s239 = sphi 0, %s238
      %s255 = sphi 0, %s239
    $region4: #{tpu_custom_call.1} parent=1 // loop_header_branch
      %29 = sbr.rel (%p27) target = $region8
    $region5: #{tpu_custom_call.1} parent=1 // loop_body
      %s31 = ssub.s32 %s26, 1
      %s32 = ssub.s32 %s26, 2
      %s33 = sadd.s32 %s26, 1
      %s34 = ssub.s32 %s26, %s33
      %p35 = scmp.eq.s32.totalorder %s34, 0
      %s37 = sadd.s32 %s36, 1
      %s38 = scalar_select %p35, %s36, %s37
      %p41 = pneg %p35
      %p42 = scmp.eq.s32.totalorder %s26, 1
      %p43 = por %p41, %p42
      %p44 = scmp.ne.s32.totalorder %s36, %s39
      %p45 = scmp.eq.s32.totalorder %s26, 0
      %p46 = por %p44, %p45
      %p47 = scmp.ne.s32.totalorder %s36, %s39
      %p48 = scmp.eq.s32.totalorder %s31, 1
      %p49 = por %p47, %p48
      %p50 = scmp.ne.s32.totalorder %s39, %s40
      %p51 = scmp.eq.s32.totalorder %s31, 0
      %p52 = por %p50, %p51
      %p53 = scmp.ne.s32.totalorder %s39, %s40
      %p54 = scmp.eq.s32.totalorder %s32, 1
      %p55 = por %p53, %p54
      %p57 = scmp.ne.s32.totalorder %s40, %s56
      %p58 = scmp.eq.s32.totalorder %s32, 0
      %p59 = por %p57, %p58
      %s60 = ssub.s32 %s26, %s33
      %p61 = scmp.eq.s32.totalorder %s60, 0
      %s63 = sadd.s32 %s62, 1
      %s64 = scalar_select %p61, %s62, %s63
      %p67 = pneg %p61
      %p68 = scmp.eq.s32.totalorder %s26, 1
      %p69 = por %p67, %p68
      %p70 = scmp.ne.s32.totalorder %s62, %s65
      %p71 = scmp.eq.s32.totalorder %s26, 0
      %p72 = por %p70, %p71
      %p73 = scmp.ne.s32.totalorder %s62, %s65
      %p74 = scmp.eq.s32.totalorder %s31, 1
      %p75 = por %p73, %p74
      %p76 = scmp.ne.s32.totalorder %s65, %s66
      %p77 = scmp.eq.s32.totalorder %s31, 0
      %p78 = por %p76, %p77
      %p79 = scmp.ne.s32.totalorder %s65, %s66
      %p80 = scmp.eq.s32.totalorder %s32, 1
      %p81 = por %p79, %p80
      %p83 = scmp.ne.s32.totalorder %s66, %s82
      %p84 = scmp.eq.s32.totalorder %s32, 0
      %p85 = por %p83, %p84
      %s87 = sadd.s32 %s86, 1
      %p90 = scmp.eq.s32.totalorder %s26, 1
      %p91 = scmp.ne.s32.totalorder %s86, %s88
      %p92 = scmp.eq.s32.totalorder %s26, 0
      %p93 = por %p91, %p92
      %p94 = scmp.ne.s32.totalorder %s86, %s88
      %p95 = scmp.eq.s32.totalorder %s31, 1
      %p96 = por %p94, %p95
      %p97 = scmp.ne.s32.totalorder %s88, %s89
      %p98 = scmp.eq.s32.totalorder %s31, 0
      %p99 = por %p97, %p98
      %p100 = scmp.ne.s32.totalorder %s88, %s89
      %p101 = scmp.eq.s32.totalorder %s32, 1
      %p102 = por %p100, %p101
      %p104 = scmp.ne.s32.totalorder %s89, %s103
      %p105 = scmp.eq.s32.totalorder %s32, 0
      %p106 = por %p104, %p105
      %s108 = sadd.s32 %s107, 1
      %p111 = scmp.eq.s32.totalorder %s26, 1
      %p112 = scmp.ne.s32.totalorder %s107, %s109
      %p113 = scmp.eq.s32.totalorder %s26, 0
      %p114 = por %p112, %p113
      %p115 = scmp.ne.s32.totalorder %s107, %s109
      %p116 = scmp.eq.s32.totalorder %s31, 1
      %p117 = por %p115, %p116
      %p118 = scmp.ne.s32.totalorder %s109, %s110
      %p119 = scmp.eq.s32.totalorder %s31, 0
      %p120 = por %p118, %p119
      %p121 = scmp.ne.s32.totalorder %s109, %s110
      %p122 = scmp.eq.s32.totalorder %s32, 1
      %p123 = por %p121, %p122
      %p125 = scmp.ne.s32.totalorder %s110, %s124
      %p126 = scmp.eq.s32.totalorder %s32, 0
      %p127 = por %p125, %p126
      %s129 = sadd.s32 %s128, 1
      %p132 = scmp.eq.s32.totalorder %s26, 1
      %p133 = scmp.ne.s32.totalorder %s128, %s130
      %p134 = scmp.eq.s32.totalorder %s26, 0
      %p135 = por %p133, %p134
      %p136 = scmp.ne.s32.totalorder %s128, %s130
      %p137 = scmp.eq.s32.totalorder %s31, 1
      %p138 = por %p136, %p137
      %p139 = scmp.ne.s32.totalorder %s130, %s131
      %p140 = scmp.eq.s32.totalorder %s31, 0
      %p141 = por %p139, %p140
      %p142 = scmp.ne.s32.totalorder %s130, %s131
      %p143 = scmp.eq.s32.totalorder %s32, 1
      %p144 = por %p142, %p143
      %p146 = scmp.ne.s32.totalorder %s131, %s145
      %p147 = scmp.eq.s32.totalorder %s32, 0
      %p148 = por %p146, %p147
      %s150 = sadd.s32 %s149, 1
      %p153 = scmp.eq.s32.totalorder %s26, 1
      %p154 = scmp.ne.s32.totalorder %s149, %s151
      %p155 = scmp.eq.s32.totalorder %s26, 0
      %p156 = por %p154, %p155
      %p157 = scmp.ne.s32.totalorder %s149, %s151
      %p158 = scmp.eq.s32.totalorder %s31, 1
      %p159 = por %p157, %p158
      %p160 = scmp.ne.s32.totalorder %s151, %s152
      %p161 = scmp.eq.s32.totalorder %s31, 0
      %p162 = por %p160, %p161
      %p163 = scmp.ne.s32.totalorder %s151, %s152
      %p164 = scmp.eq.s32.totalorder %s32, 1
      %p165 = por %p163, %p164
      %p167 = scmp.ne.s32.totalorder %s152, %s166
      %p168 = scmp.eq.s32.totalorder %s32, 0
      %p169 = por %p167, %p168
      %s171 = sadd.s32 %s170, 1
      %p174 = scmp.eq.s32.totalorder %s26, 1
      %p175 = scmp.ne.s32.totalorder %s170, %s172
      %p176 = scmp.eq.s32.totalorder %s26, 0
      %p177 = por %p175, %p176
      %p178 = scmp.ne.s32.totalorder %s170, %s172
      %p179 = scmp.eq.s32.totalorder %s31, 1
      %p180 = por %p178, %p179
      %p181 = scmp.ne.s32.totalorder %s172, %s173
      %p182 = scmp.eq.s32.totalorder %s31, 0
      %p183 = por %p181, %p182
      %p184 = scmp.ne.s32.totalorder %s172, %s173
      %p185 = scmp.eq.s32.totalorder %s32, 1
      %p186 = por %p184, %p185
      %p188 = scmp.ne.s32.totalorder %s173, %s187
      %p189 = scmp.eq.s32.totalorder %s32, 0
      %p190 = por %p188, %p189
      %s192 = sadd.s32 %s191, 1
      %p195 = scmp.eq.s32.totalorder %s26, 1
      %p196 = scmp.ne.s32.totalorder %s191, %s193
      %p197 = scmp.eq.s32.totalorder %s26, 0
      %p198 = por %p196, %p197
      %p199 = scmp.ne.s32.totalorder %s191, %s193
      %p200 = scmp.eq.s32.totalorder %s31, 1
      %p201 = por %p199, %p200
      %p202 = scmp.ne.s32.totalorder %s193, %s194
      %p203 = scmp.eq.s32.totalorder %s31, 0
      %p204 = por %p202, %p203
      %p205 = scmp.ne.s32.totalorder %s193, %s194
      %p206 = scmp.eq.s32.totalorder %s32, 1
      %p207 = por %p205, %p206
      %p209 = scmp.ne.s32.totalorder %s194, %s208
      %p210 = scmp.eq.s32.totalorder %s32, 0
      %p211 = por %p209, %p210
      %s213 = sadd.s32 %s212, 1
      %p216 = scmp.eq.s32.totalorder %s26, 1
      %p217 = scmp.ne.s32.totalorder %s212, %s214
      %p218 = scmp.eq.s32.totalorder %s26, 0
      %p219 = por %p217, %p218
      %p220 = scmp.ne.s32.totalorder %s212, %s214
      %p221 = scmp.eq.s32.totalorder %s31, 1
      %p222 = por %p220, %p221
      %p223 = scmp.ne.s32.totalorder %s214, %s215
      %p224 = scmp.eq.s32.totalorder %s31, 0
      %p225 = por %p223, %p224
      %p226 = scmp.ne.s32.totalorder %s214, %s215
      %p227 = scmp.eq.s32.totalorder %s32, 1
      %p228 = por %p226, %p227
      %p230 = scmp.ne.s32.totalorder %s215, %s229
      %p231 = scmp.eq.s32.totalorder %s32, 0
      %p232 = por %p230, %p231
      %s233 = ssub.s32 %s26, %s33
      %p234 = scmp.eq.s32.totalorder %s233, 0
      %s236 = sadd.s32 %s235, 1
      %s237 = scalar_select %p234, %s235, %s236
      %p240 = pneg %p234
      %p241 = scmp.eq.s32.totalorder %s26, 1
      %p242 = por %p240, %p241
      %p243 = scmp.ne.s32.totalorder %s235, %s238
      %p244 = scmp.eq.s32.totalorder %s26, 0
      %p245 = por %p243, %p244
      %p246 = scmp.ne.s32.totalorder %s235, %s238
      %p247 = scmp.eq.s32.totalorder %s31, 1
      %p248 = por %p246, %p247
      %p249 = scmp.ne.s32.totalorder %s238, %s239
      %p250 = scmp.eq.s32.totalorder %s31, 0
      %p251 = por %p249, %p250
      %p252 = scmp.ne.s32.totalorder %s238, %s239
      %p253 = scmp.eq.s32.totalorder %s32, 1
      %p254 = por %p252, %p253
      %p256 = scmp.ne.s32.totalorder %s239, %s255
      %p257 = scmp.eq.s32.totalorder %s32, 0
      %p258 = por %p256, %p257
      %p259 = scmp.le.s32.totalorder 1, %s26
      %p260 = scmp.lt.s32.totalorder %s26, 3
      %p261 = pnand %p259, %p260
      %p262 = pneg %p261
      // Predicated region
      $region9: #{tpu_custom_call.1} parent=5 // pred_check
        _
      $region10: #{tpu_custom_call.1} parent=5 // pred_check_branch
        %264 = sbr.rel (%p261) target = $region12
      $region11: #{tpu_custom_call.1} parent=5 // pred_region
        %s265 = ssub.s32 %s26, 1
        // Predicated region
        $region13: #{tpu_custom_call.1} parent=11 // pred_check
          %p266 = pneg %p99
        $region14: #{tpu_custom_call.1} parent=11 // pred_check_branch
          %268 = sbr.rel (%p266) target = $region16
        $region15: #{tpu_custom_call.1} parent=11 // pred_region
          %s270 = ssub.s32 512, 512
          %271 = vsyncadd [#allocation6], %s270
          %s272 = sshll.u32 [#allocation7], 4
          %s273 = int_to_ptr.vmem [resolvable:$true] %s272
          %278 = dma.hbm_to_vmem [thread:$0]  %s2, 512, %s273, [#allocation6], 128, 128, 8
        $region16: #{tpu_custom_call.1} parent=11 // pred_fallthru
          _
        // Predicated region
        $region17: #{tpu_custom_call.1} parent=11 // pred_check
          %p279 = pneg %p120
        $region18: #{tpu_custom_call.1} parent=11 // pred_check_branch
          %281 = sbr.rel (%p279) target = $region20
        $region19: #{tpu_custom_call.1} parent=11 // pred_region
          %s283 = ssub.s32 512, 512
          %284 = vsyncadd [#allocation9], %s283
          %s285 = sshll.u32 [#allocation8], 4
          %s286 = int_to_ptr.vmem [resolvable:$true] %s285
          %291 = dma.hbm_to_vmem [thread:$0]  %s3, 512, %s286, [#allocation9], 128, 128, 8
        $region20: #{tpu_custom_call.1} parent=11 // pred_fallthru
          _
        // Predicated region
        $region21: #{tpu_custom_call.1} parent=11 // pred_check
          %p292 = pneg %p141
        $region22: #{tpu_custom_call.1} parent=11 // pred_check_branch
          %294 = sbr.rel (%p292) target = $region24
        $region23: #{tpu_custom_call.1} parent=11 // pred_region
          _
        $region24: #{tpu_custom_call.1} parent=11 // pred_fallthru
          _
        // Predicated region
        $region25: #{tpu_custom_call.1} parent=11 // pred_check
          %p295 = pneg %p162
        $region26: #{tpu_custom_call.1} parent=11 // pred_check_branch
          %297 = sbr.rel (%p295) target = $region28
        $region27: #{tpu_custom_call.1} parent=11 // pred_region
          _
        $region28: #{tpu_custom_call.1} parent=11 // pred_fallthru
          _
        // Predicated region
        $region29: #{tpu_custom_call.1} parent=11 // pred_check
          %p298 = pneg %p183
        $region30: #{tpu_custom_call.1} parent=11 // pred_check_branch
          %300 = sbr.rel (%p298) target = $region32
        $region31: #{tpu_custom_call.1} parent=11 // pred_region
          %s302 = ssub.s32 512, 512
          %303 = vsyncadd [#allocation9], %s302
          %s304 = sshll.u32 [#allocation10], 4
          %s305 = int_to_ptr.vmem [resolvable:$true] %s304
          %310 = dma.hbm_to_vmem [thread:$0]  %s6, 512, %s305, [#allocation9], 128, 128, 8
        $region32: #{tpu_custom_call.1} parent=11 // pred_fallthru
          _
        // Predicated region
        $region33: #{tpu_custom_call.1} parent=11 // pred_check
          %p311 = pneg %p204
        $region34: #{tpu_custom_call.1} parent=11 // pred_check_branch
          %313 = sbr.rel (%p311) target = $region36
        $region35: #{tpu_custom_call.1} parent=11 // pred_region
          %s315 = ssub.s32 512, 512
          %316 = vsyncadd [#allocation12], %s315
          %s317 = sshll.u32 [#allocation11], 4
          %s318 = int_to_ptr.vmem [resolvable:$true] %s317
          %323 = dma.hbm_to_vmem [thread:$0]  %s7, 512, %s318, [#allocation12], 128, 128, 8
        $region36: #{tpu_custom_call.1} parent=11 // pred_fallthru
          _
        // Predicated region
        $region37: #{tpu_custom_call.1} parent=11 // pred_check
          %p324 = pneg %p225
        $region38: #{tpu_custom_call.1} parent=11 // pred_check_branch
          %326 = sbr.rel (%p324) target = $region40
        $region39: #{tpu_custom_call.1} parent=11 // pred_region
          _
        $region40: #{tpu_custom_call.1} parent=11 // pred_fallthru
          _
      $region12: #{tpu_custom_call.1} parent=5 // pred_fallthru
        _
      %p327 = scmp.lt.s32.totalorder %s26, 2
      // Predicated region
      $region41: #{tpu_custom_call.1} parent=5 // pred_check
        %p328 = pneg %p327
      $region42: #{tpu_custom_call.1} parent=5 // pred_check_branch
        %330 = sbr.rel (%p328) target = $region44
      $region43: #{tpu_custom_call.1} parent=5 // pred_region
        // Predicated region
        $region45: #{tpu_custom_call.1} parent=43 // pred_check
          %p331 = pneg %p46
        $region46: #{tpu_custom_call.1} parent=43 // pred_check_branch
          %333 = sbr.rel (%p331) target = $region48
        $region47: #{tpu_custom_call.1} parent=43 // pred_region
          %s334 = sand.u32 %s36, 1
          %s335 = scalar_lea.sflag [#allocation3], %s334
          %s336 = sand.u32 %s36, 1
          %s337 = smul.addr %s336, 8
          %s338 = scalar_lea.vmem [#allocation2], %s337
          %s340 = ssub.s32 128, 128
          %341 = vsyncadd %s335, %s340
          %s342 = smul.addr %s26, 128
          %s343 = scalar_lea.hbm %s0, %s342
          %s345 = sshll.u32 %s338, 4
          %s346 = int_to_ptr.vmem [resolvable:$true] %s345
          %348 = dma.hbm_to_vmem [thread:$0]  %s343, 128, %s346, %s335
        $region48: #{tpu_custom_call.1} parent=43 // pred_fallthru
          _
        // Predicated region
        $region49: #{tpu_custom_call.1} parent=43 // pred_check
          %p349 = pneg %p72
        $region50: #{tpu_custom_call.1} parent=43 // pred_check_branch
          %351 = sbr.rel (%p349) target = $region52
        $region51: #{tpu_custom_call.1} parent=43 // pred_region
          %s352 = sand.u32 %s26, 1
          %s353 = scalar_lea.sflag [#allocation6], %s352
          %s354 = sand.u32 %s62, 1
          %s355 = smul.addr %s354, 8
          %s356 = scalar_lea.vmem [#allocation5], %s355
          %s358 = ssub.s32 128, 128
          %359 = vsyncadd %s353, %s358
          %s360 = smul.addr %s26, 128
          %s361 = scalar_lea.hbm %s1, %s360
          %s363 = sshll.u32 %s356, 4
          %s364 = int_to_ptr.vmem [resolvable:$true] %s363
          %366 = dma.hbm_to_vmem [thread:$0]  %s361, 128, %s364, %s353
        $region52: #{tpu_custom_call.1} parent=43 // pred_fallthru
          _
      $region44: #{tpu_custom_call.1} parent=5 // pred_fallthru
        _
      %p367 = scmp.le.s32.totalorder 1, %s26
      %p368 = scmp.lt.s32.totalorder %s26, 3
      %p369 = pnand %p367, %p368
      %p370 = pneg %p369
      // Predicated region
      $region53: #{tpu_custom_call.1} parent=5 // pred_check
        _
      $region54: #{tpu_custom_call.1} parent=5 // pred_check_branch
        %372 = sbr.rel (%p369) target = $region56
      $region55: #{tpu_custom_call.1} parent=5 // pred_region
        %s373 = ssub.s32 %s26, 1
        %s374 = sand.u32 %s39, 1
        %s375 = scalar_lea.sflag [#allocation3], %s374
        %s376 = sand.u32 %s39, 1
        %s377 = smul.addr %s376, 8
        %s378 = scalar_lea.vmem [#allocation2], %s377
        // Predicated region
        $region57: #{tpu_custom_call.1} parent=55 // pred_check
          %p379 = pneg %p52
        $region58: #{tpu_custom_call.1} parent=55 // pred_check_branch
          %381 = sbr.rel (%p379) target = $region60
        $region59: #{tpu_custom_call.1} parent=55 // pred_region
          %382 = dma.done %s375, 128
        $region60: #{tpu_custom_call.1} parent=55 // pred_fallthru
          _
        %s383 = sand.u32 %s31, 1
        %s384 = scalar_lea.sflag [#allocation6], %s383
        %s385 = sand.u32 %s65, 1
        %s386 = smul.addr %s385, 8
        %s387 = scalar_lea.vmem [#allocation5], %s386
        // Predicated region
        $region61: #{tpu_custom_call.1} parent=55 // pred_check
          %p388 = pneg %p78
        $region62: #{tpu_custom_call.1} parent=55 // pred_check_branch
          %390 = sbr.rel (%p388) target = $region64
        $region63: #{tpu_custom_call.1} parent=55 // pred_region
          %391 = dma.done %s384, 128
        $region64: #{tpu_custom_call.1} parent=55 // pred_fallthru
          _
        // Predicated region
        $region65: #{tpu_custom_call.1} parent=55 // pred_check
          %p392 = pneg %p99
        $region66: #{tpu_custom_call.1} parent=55 // pred_check_branch
          %394 = sbr.rel (%p392) target = $region68
        $region67: #{tpu_custom_call.1} parent=55 // pred_region
          %395 = dma.done [#allocation6], 512
        $region68: #{tpu_custom_call.1} parent=55 // pred_fallthru
          _
        // Predicated region
        $region69: #{tpu_custom_call.1} parent=55 // pred_check
          %p396 = pneg %p120
        $region70: #{tpu_custom_call.1} parent=55 // pred_check_branch
          %398 = sbr.rel (%p396) target = $region72
        $region71: #{tpu_custom_call.1} parent=55 // pred_region
          %399 = dma.done [#allocation9], 512
        $region72: #{tpu_custom_call.1} parent=55 // pred_fallthru
          _
        // Predicated region
        $region73: #{tpu_custom_call.1} parent=55 // pred_check
          %p400 = pneg %p183
        $region74: #{tpu_custom_call.1} parent=55 // pred_check_branch
          %402 = sbr.rel (%p400) target = $region76
        $region75: #{tpu_custom_call.1} parent=55 // pred_region
          %403 = dma.done [#allocation9], 512
        $region76: #{tpu_custom_call.1} parent=55 // pred_fallthru
          _
        // Predicated region
        $region77: #{tpu_custom_call.1} parent=55 // pred_check
          %p404 = pneg %p204
        $region78: #{tpu_custom_call.1} parent=55 // pred_check_branch
          %406 = sbr.rel (%p404) target = $region80
        $region79: #{tpu_custom_call.1} parent=55 // pred_region
          %407 = dma.done [#allocation12], 512
        $region80: #{tpu_custom_call.1} parent=55 // pred_fallthru
          _
        %s408 = sand.u32 %s39, 1
        %s409 = scalar_lea.sflag [#allocation3], %s408
        %s410 = sand.u32 %s39, 1
        %s411 = smul.addr %s410, 8
        %s412 = scalar_lea.vmem [#allocation2], %s411
        %p413 = pneg %p52
        %p414 = pneg %p49
        %s415 = sand.u32 %s31, 1
        %s416 = scalar_lea.sflag [#allocation6], %s415
        %s417 = sand.u32 %s65, 1
        %s418 = smul.addr %s417, 8
        %s419 = scalar_lea.vmem [#allocation5], %s418
        %p420 = pneg %p78
        %p421 = pneg %p75
        %p422 = pneg %p99
        %p423 = pneg %p96
        %p424 = pneg %p120
        %p425 = pneg %p117
        %p426 = pneg %p141
        %p427 = pneg %p138
        %p428 = pneg %p162
        %p429 = pneg %p159
        %p430 = pneg %p183
        %p431 = pneg %p180
        %p432 = pneg %p204
        %p433 = pneg %p201
        %p434 = pneg %p225
        %p435 = pneg %p222
        %p436 = pneg %p251
        %p437 = pneg %p248
        %s438 = sand.u32 %s238, 1
        %s439 = scalar_lea.sflag [#allocation4], %s438
        %s440 = sand.u32 %s238, 1
        %s441 = smul.addr %s440, 8
        %s442 = scalar_lea.vmem [#allocation13], %s441
        %v443 = vld [vmem:[%s378] sm:$0xff]
        %v444 = vld [vmem:[%s387] sm:$0xff]
        %v445 = vld [vmem:[#allocation7] sm:$0xff]
        %v446 = vld [vmem:[#allocation7 + $0x8] sm:$0xff]
        %v447 = vld [vmem:[#allocation7 + $0x10] sm:$0xff]
        %v448 = vld [vmem:[#allocation7 + $0x18] sm:$0xff]
        %v449 = vld [vmem:[%s4] sm:$0x1]
        %v451 = vlaneseq
        %v452 = vshrl.u32 %v451, 7
        %v453 = vsub.s32 0, %v452
        %v454 = vrot.slane %v449, %v453
        %vm456 = vcmask 261120
        %v458 = vsel %vm456, %v443, 0
        %460 = vmatprep.subr.mxu0 0.0
        %461 = vmatpush1.msra.mxu0 0.0
        %462 = vmatprep.subr.mxu0 0.0
        %463 = vmatpush1.msra.mxu0 0.0
        %464 = vmatprep.subr.mxu0 0.0
        %465 = vmatpush1.msra.mxu0 0.0
        %466 = vmatprep.subr.mxu0 0.0
        %467 = vmatpush1.msra.mxu0 0.0
        %468 = vmatprep.subr.mxu0 0.0
        %469 = vmatpush1.msra.mxu0 0.0
        %470 = vmatprep.subr.mxu0 0.0
        %471 = vmatpush1.msra.mxu0 0.0
        %472 = vmatprep.subr.mxu0 0.0
        %473 = vmatpush1.msra.mxu0 0.0
        %474 = vmatprep.subr.mxu0 0.0
        %475 = vmatpush1.msra.mxu0 0.0
        %476 = vmatprep.subr.mxu0 0.0
        %477 = vmatpush1.msra.mxu0 0.0
        %478 = vmatprep.subr.mxu0 0.0
        %479 = vmatpush1.msra.mxu0 0.0
        %480 = vmatprep.subr.mxu0 0.0
        %481 = vmatpush1.msra.mxu0 0.0
        %482 = vmatprep.subr.mxu0 0.0
        %483 = vmatpush1.msra.mxu0 0.0
        %484 = vmatprep.subr.mxu0 0.0
        %485 = vmatpush1.msra.mxu0 %v448
        %486 = vmatprep.subr.mxu0 0.0
        %487 = vmatpush1.msra.mxu0 %v447
        %488 = vmatprep.subr.mxu0 0.0
        %489 = vmatpush1.msra.mxu0 %v446
        %490 = vmatprep.subr.mxu0 0.0
        %491 = vmatpush1.msra.mxu0 %v445
        %492 = vmatprep.subr.mxu0 0.0
        %493 = vmatpush2.msra.mxu0 0.0
        %494 = vmatprep.subr.mxu0 0.0
        %495 = vmatpush2.msra.mxu0 0.0
        %496 = vmatprep.subr.mxu0 0.0
        %497 = vmatpush2.msra.mxu0 0.0
        %498 = vmatprep.subr.mxu0 0.0
        %499 = vmatpush2.msra.mxu0 0.0
        %500 = vmatprep.subr.mxu0 0.0
        %501 = vmatpush2.msra.mxu0 0.0
        %502 = vmatprep.subr.mxu0 0.0
        %503 = vmatpush2.msra.mxu0 0.0
        %504 = vmatprep.subr.mxu0 0.0
        %505 = vmatpush2.msra.mxu0 0.0
        %506 = vmatprep.subr.mxu0 0.0
        %507 = vmatpush2.msra.mxu0 0.0
        %508 = vmatprep.subr.mxu0 0.0
        %509 = vmatpush2.msra.mxu0 0.0
        %510 = vmatprep.subr.mxu0 0.0
        %511 = vmatpush2.msra.mxu0 0.0
        %512 = vmatprep.subr.mxu0 0.0
        %513 = vmatpush2.msra.mxu0 0.0
        %514 = vmatprep.subr.mxu0 0.0
        %515 = vmatpush2.msra.mxu0 0.0
        %516 = vmatprep.subr.mxu0 0.0
        %517 = vmatpush2.msra.mxu0 0.0
        %518 = vmatprep.subr.mxu0 0.0
        %519 = vmatpush2.msra.mxu0 0.0
        %520 = vmatprep.subr.mxu0 0.0
        %521 = vmatpush2.msra.mxu0 0.0
        %522 = vmatprep.subr.mxu0 0.0
        %523 = vmatpush2.msra.mxu0 0.0
        %524 = vmatprep.mubr.f32.mxu0 0.0
        %525 = vmatmul.mubr.f32.gmra.mxu0 %v458
        %v526 = vpop.f32.mrf.mxu0
        %v527 = vadd.f32 %v454, %v526
        %v528 = vpop.f32.mrf.mxu0
        %529 = vdwg.mxu0
        %v530 = vld [vmem:[#allocation8] sm:$0xff]
        %v531 = vld [vmem:[#allocation8 + $0x8] sm:$0xff]
        %v532 = vld [vmem:[#allocation8 + $0x10] sm:$0xff]
        %v533 = vld [vmem:[#allocation8 + $0x18] sm:$0xff]
        %v534 = vld [vmem:[%s5] sm:$0x1]
        %v536 = vlaneseq
        %v537 = vshrl.u32 %v536, 7
        %v538 = vsub.s32 0, %v537
        %v539 = vrot.slane %v534, %v538
        %v542 = vsel %vm456, %v444, 0
        %544 = vmatprep.subr.mxu0 0.0
        %545 = vmatpush1.msra.mxu0 0.0
        %546 = vmatprep.subr.mxu0 0.0
        %547 = vmatpush1.msra.mxu0 0.0
        %548 = vmatprep.subr.mxu0 0.0
        %549 = vmatpush1.msra.mxu0 0.0
        %550 = vmatprep.subr.mxu0 0.0
        %551 = vmatpush1.msra.mxu0 0.0
        %552 = vmatprep.subr.mxu0 0.0
        %553 = vmatpush1.msra.mxu0 0.0
        %554 = vmatprep.subr.mxu0 0.0
        %555 = vmatpush1.msra.mxu0 0.0
        %556 = vmatprep.subr.mxu0 0.0
        %557 = vmatpush1.msra.mxu0 0.0
        %558 = vmatprep.subr.mxu0 0.0
        %559 = vmatpush1.msra.mxu0 0.0
        %560 = vmatprep.subr.mxu0 0.0
        %561 = vmatpush1.msra.mxu0 0.0
        %562 = vmatprep.subr.mxu0 0.0
        %563 = vmatpush1.msra.mxu0 0.0
        %564 = vmatprep.subr.mxu0 0.0
        %565 = vmatpush1.msra.mxu0 0.0
        %566 = vmatprep.subr.mxu0 0.0
        %567 = vmatpush1.msra.mxu0 0.0
        %568 = vmatprep.subr.mxu0 0.0
        %569 = vmatpush1.msra.mxu0 %v533
        %570 = vmatprep.subr.mxu0 0.0
        %571 = vmatpush1.msra.mxu0 %v532
        %572 = vmatprep.subr.mxu0 0.0
        %573 = vmatpush1.msra.mxu0 %v531
        %574 = vmatprep.subr.mxu0 0.0
        %575 = vmatpush1.msra.mxu0 %v530
        %576 = vmatprep.subr.mxu0 0.0
        %577 = vmatpush2.msra.mxu0 0.0
        %578 = vmatprep.subr.mxu0 0.0
        %579 = vmatpush2.msra.mxu0 0.0
        %580 = vmatprep.subr.mxu0 0.0
        %581 = vmatpush2.msra.mxu0 0.0
        %582 = vmatprep.subr.mxu0 0.0
        %583 = vmatpush2.msra.mxu0 0.0
        %584 = vmatprep.subr.mxu0 0.0
        %585 = vmatpush2.msra.mxu0 0.0
        %586 = vmatprep.subr.mxu0 0.0
        %587 = vmatpush2.msra.mxu0 0.0
        %588 = vmatprep.subr.mxu0 0.0
        %589 = vmatpush2.msra.mxu0 0.0
        %590 = vmatprep.subr.mxu0 0.0
        %591 = vmatpush2.msra.mxu0 0.0
        %592 = vmatprep.subr.mxu0 0.0
        %593 = vmatpush2.msra.mxu0 0.0
        %594 = vmatprep.subr.mxu0 0.0
        %595 = vmatpush2.msra.mxu0 0.0
        %596 = vmatprep.subr.mxu0 0.0
        %597 = vmatpush2.msra.mxu0 0.0
        %598 = vmatprep.subr.mxu0 0.0
        %599 = vmatpush2.msra.mxu0 0.0
        %600 = vmatprep.subr.mxu0 0.0
        %601 = vmatpush2.msra.mxu0 0.0
        %602 = vmatprep.subr.mxu0 0.0
        %603 = vmatpush2.msra.mxu0 0.0
        %604 = vmatprep.subr.mxu0 0.0
        %605 = vmatpush2.msra.mxu0 0.0
        %606 = vmatprep.subr.mxu0 0.0
        %607 = vmatpush2.msra.mxu0 0.0
        %608 = vmatprep.mubr.f32.mxu0 0.0
        %609 = vmatmul.mubr.f32.gmra.mxu0 %v542
        %v610 = vpop.f32.mrf.mxu0
        %v611 = vadd.f32 %v539, %v610
        %v612 = vpop.f32.mrf.mxu0
        %613 = vdwg.mxu0
        %v614 = vld [vmem:[#allocation10] sm:$0xff]
        %v615 = vld [vmem:[#allocation10 + $0x8] sm:$0xff]
        %v616 = vld [vmem:[#allocation10 + $0x10] sm:$0xff]
        %v617 = vld [vmem:[#allocation10 + $0x18] sm:$0xff]
        %v618 = vld [vmem:[#allocation11] sm:$0xff]
        %v619 = vld [vmem:[#allocation11 + $0x8] sm:$0xff]
        %v620 = vld [vmem:[#allocation11 + $0x10] sm:$0xff]
        %v621 = vld [vmem:[#allocation11 + $0x18] sm:$0xff]
        %v623 = vsel %vm456, %v611, 0
        %625 = vmatprep.subr.mxu0 0.0
        %626 = vmatpush1.msra.mxu0 0.0
        %627 = vmatprep.subr.mxu0 0.0
        %628 = vmatpush1.msra.mxu0 0.0
        %629 = vmatprep.subr.mxu0 0.0
        %630 = vmatpush1.msra.mxu0 0.0
        %631 = vmatprep.subr.mxu0 0.0
        %632 = vmatpush1.msra.mxu0 0.0
        %633 = vmatprep.subr.mxu0 0.0
        %634 = vmatpush1.msra.mxu0 0.0
        %635 = vmatprep.subr.mxu0 0.0
        %636 = vmatpush1.msra.mxu0 0.0
        %637 = vmatprep.subr.mxu0 0.0
        %638 = vmatpush1.msra.mxu0 0.0
        %639 = vmatprep.subr.mxu0 0.0
        %640 = vmatpush1.msra.mxu0 0.0
        %641 = vmatprep.subr.mxu0 0.0
        %642 = vmatpush1.msra.mxu0 0.0
        %643 = vmatprep.subr.mxu0 0.0
        %644 = vmatpush1.msra.mxu0 0.0
        %645 = vmatprep.subr.mxu0 0.0
        %646 = vmatpush1.msra.mxu0 0.0
        %647 = vmatprep.subr.mxu0 0.0
        %648 = vmatpush1.msra.mxu0 0.0
        %649 = vmatprep.subr.mxu0 0.0
        %650 = vmatpush1.msra.mxu0 %v621
        %651 = vmatprep.subr.mxu0 0.0
        %652 = vmatpush1.msra.mxu0 %v620
        %653 = vmatprep.subr.mxu0 0.0
        %654 = vmatpush1.msra.mxu0 %v619
        %655 = vmatprep.subr.mxu0 0.0
        %656 = vmatpush1.msra.mxu0 %v618
        %657 = vmatprep.subr.mxu0 0.0
        %658 = vmatpush2.msra.mxu0 0.0
        %659 = vmatprep.subr.mxu0 0.0
        %660 = vmatpush2.msra.mxu0 0.0
        %661 = vmatprep.subr.mxu0 0.0
        %662 = vmatpush2.msra.mxu0 0.0
        %663 = vmatprep.subr.mxu0 0.0
        %664 = vmatpush2.msra.mxu0 0.0
        %665 = vmatprep.subr.mxu0 0.0
        %666 = vmatpush2.msra.mxu0 0.0
        %667 = vmatprep.subr.mxu0 0.0
        %668 = vmatpush2.msra.mxu0 0.0
        %669 = vmatprep.subr.mxu0 0.0
        %670 = vmatpush2.msra.mxu0 0.0
        %671 = vmatprep.subr.mxu0 0.0
        %672 = vmatpush2.msra.mxu0 0.0
        %673 = vmatprep.subr.mxu0 0.0
        %674 = vmatpush2.msra.mxu0 0.0
        %675 = vmatprep.subr.mxu0 0.0
        %676 = vmatpush2.msra.mxu0 0.0
        %677 = vmatprep.subr.mxu0 0.0
        %678 = vmatpush2.msra.mxu0 0.0
        %679 = vmatprep.subr.mxu0 0.0
        %680 = vmatpush2.msra.mxu0 0.0
        %681 = vmatprep.subr.mxu0 0.0
        %682 = vmatpush2.msra.mxu0 0.0
        %683 = vmatprep.subr.mxu0 0.0
        %684 = vmatpush2.msra.mxu0 0.0
        %685 = vmatprep.subr.mxu0 0.0
        %686 = vmatpush2.msra.mxu0 0.0
        %687 = vmatprep.subr.mxu0 0.0
        %688 = vmatpush2.msra.mxu0 0.0
        %689 = vmatprep.mubr.f32.mxu0 0.0
        %690 = vmatmul.mubr.f32.gmra.mxu0 %v623
        %v691 = vpop.f32.mrf.mxu0
        %v692 = vadd.f32 0.0, %v691
        %v693 = vpop.f32.mrf.mxu0
        %694 = vdwg.mxu0
        %v696 = vsel %vm456, %v527, 0
        %698 = vmatprep.subr.mxu0 0.0
        %699 = vmatpush1.msra.mxu0 0.0
        %700 = vmatprep.subr.mxu0 0.0
        %701 = vmatpush1.msra.mxu0 0.0
        %702 = vmatprep.subr.mxu0 0.0
        %703 = vmatpush1.msra.mxu0 0.0
        %704 = vmatprep.subr.mxu0 0.0
        %705 = vmatpush1.msra.mxu0 0.0
        %706 = vmatprep.subr.mxu0 0.0
        %707 = vmatpush1.msra.mxu0 0.0
        %708 = vmatprep.subr.mxu0 0.0
        %709 = vmatpush1.msra.mxu0 0.0
        %710 = vmatprep.subr.mxu0 0.0
        %711 = vmatpush1.msra.mxu0 0.0
        %712 = vmatprep.subr.mxu0 0.0
        %713 = vmatpush1.msra.mxu0 0.0
        %714 = vmatprep.subr.mxu0 0.0
        %715 = vmatpush1.msra.mxu0 0.0
        %716 = vmatprep.subr.mxu0 0.0
        %717 = vmatpush1.msra.mxu0 0.0
        %718 = vmatprep.subr.mxu0 0.0
        %719 = vmatpush1.msra.mxu0 0.0
        %720 = vmatprep.subr.mxu0 0.0
        %721 = vmatpush1.msra.mxu0 0.0
        %722 = vmatprep.subr.mxu0 0.0
        %723 = vmatpush1.msra.mxu0 %v617
        %724 = vmatprep.subr.mxu0 0.0
        %725 = vmatpush1.msra.mxu0 %v616
        %726 = vmatprep.subr.mxu0 0.0
        %727 = vmatpush1.msra.mxu0 %v615
        %728 = vmatprep.subr.mxu0 0.0
        %729 = vmatpush1.msra.mxu0 %v614
        %730 = vmatprep.subr.mxu0 0.0
        %731 = vmatpush2.msra.mxu0 0.0
        %732 = vmatprep.subr.mxu0 0.0
        %733 = vmatpush2.msra.mxu0 0.0
        %734 = vmatprep.subr.mxu0 0.0
        %735 = vmatpush2.msra.mxu0 0.0
        %736 = vmatprep.subr.mxu0 0.0
        %737 = vmatpush2.msra.mxu0 0.0
        %738 = vmatprep.subr.mxu0 0.0
        %739 = vmatpush2.msra.mxu0 0.0
        %740 = vmatprep.subr.mxu0 0.0
        %741 = vmatpush2.msra.mxu0 0.0
        %742 = vmatprep.subr.mxu0 0.0
        %743 = vmatpush2.msra.mxu0 0.0
        %744 = vmatprep.subr.mxu0 0.0
        %745 = vmatpush2.msra.mxu0 0.0
        %746 = vmatprep.subr.mxu0 0.0
        %747 = vmatpush2.msra.mxu0 0.0
        %748 = vmatprep.subr.mxu0 0.0
        %749 = vmatpush2.msra.mxu0 0.0
        %750 = vmatprep.subr.mxu0 0.0
        %751 = vmatpush2.msra.mxu0 0.0
        %752 = vmatprep.subr.mxu0 0.0
        %753 = vmatpush2.msra.mxu0 0.0
        %754 = vmatprep.subr.mxu0 0.0
        %755 = vmatpush2.msra.mxu0 0.0
        %756 = vmatprep.subr.mxu0 0.0
        %757 = vmatpush2.msra.mxu0 0.0
        %758 = vmatprep.subr.mxu0 0.0
        %759 = vmatpush2.msra.mxu0 0.0
        %760 = vmatprep.subr.mxu0 0.0
        %761 = vmatpush2.msra.mxu0 0.0
        %762 = vmatprep.mubr.f32.mxu0 0.0
        %763 = vmatmul.mubr.f32.gmra.mxu0 %v696
        %v764 = vpop.f32.mrf.mxu0
        %v765 = vadd.f32 %v692, %v764
        %v766 = vpop.f32.mrf.mxu0
        %767 = vdwg.mxu0
        %v768 = vld [vmem:[%s8] sm:$0x1]
        %v770 = vlaneseq
        %v771 = vshrl.u32 %v770, 7
        %v772 = vsub.s32 0, %v771
        %v773 = vrot.slane %v768, %v772
        %v775 = vadd.f32 %v765, %v773
        %v776 = vxor.u32 %v775, 2147483648
        %v777 = vmul.f32 %v776, 1.442695
        %v778 = vpow.pop %v777
        %v779 = vadd.f32 %v778, 1.0
        %v780 = vrcp.pop %v779
        %v781 = vmul.f32 1.0, %v780
        %v782 = vsub.f32 %v527, %v611
        %v783 = vmul.f32 %v781, %v782
        %v784 = vadd.f32 %v611, %v783
        %785 = vst.msk [vmem:[%s442] sm:$0xff] %vm456, %v784
        %s786 = sand.u32 %s238, 1
        %s787 = scalar_lea.sflag [#allocation4], %s786
        %s788 = sand.u32 %s238, 1
        %s789 = smul.addr %s788, 8
        %s790 = scalar_lea.vmem [#allocation13], %s789
        // Predicated region
        $region81: #{tpu_custom_call.1} parent=55 // pred_check
          %p791 = pneg %p248
        $region82: #{tpu_custom_call.1} parent=55 // pred_check_branch
          %793 = sbr.rel (%p791) target = $region84
        $region83: #{tpu_custom_call.1} parent=55 // pred_region
          %s795 = ssub.s32 128, 128
          %796 = vsyncadd %s787, %s795
          %s797 = smul.addr %s31, 128
          %s798 = scalar_lea.hbm %s9, %s797
          %s800 = sshll.u32 %s790, 4
          %s801 = int_to_ptr.vmem [resolvable:$true] %s800
          %803 = dma.vmem_to_hbm [thread:$0]  %s801, 128, %s798, %s787
        $region84: #{tpu_custom_call.1} parent=55 // pred_fallthru
          _
      $region56: #{tpu_custom_call.1} parent=5 // pred_fallthru
        _
      %p804 = scmp.le.s32.totalorder 2, %s26
      // Predicated region
      $region85: #{tpu_custom_call.1} parent=5 // pred_check
        %p805 = pneg %p804
      $region86: #{tpu_custom_call.1} parent=5 // pred_check_branch
        %807 = sbr.rel (%p805) target = $region88
      $region87: #{tpu_custom_call.1} parent=5 // pred_region
        %s808 = ssub.s32 %s26, 2
        // Predicated region
        $region89: #{tpu_custom_call.1} parent=87 // pred_check
          %p809 = pneg %p254
        $region90: #{tpu_custom_call.1} parent=87 // pred_check_branch
          %811 = sbr.rel (%p809) target = $region92
        $region91: #{tpu_custom_call.1} parent=87 // pred_region
          %s812 = sand.u32 %s239, 1
          %s813 = scalar_lea.sflag [#allocation4], %s812
          %s814 = sand.u32 %s239, 1
          %s815 = smul.addr %s814, 8
          %s816 = scalar_lea.vmem [#allocation13], %s815
          %817 = dma.done %s813, 128
        $region92: #{tpu_custom_call.1} parent=87 // pred_fallthru
          _
      $region88: #{tpu_custom_call.1} parent=5 // pred_fallthru
        _
    $region6: #{tpu_custom_call.1} parent=1 // loop_footer
      %s30 = sadd.s32 1, %s26
    $region7: #{tpu_custom_call.1} parent=1 // loop_footer_branch
      %25 = sbr.rel target = $region3
    $region8: #{tpu_custom_call.1} parent=1 // loop_exit
      _
    %818 = vsyncpa [#allocation3], 1
    %s819 = scalar_lea.sflag [#allocation3], 1
    %820 = vsyncpa %s819, 1
    %821 = vsyncpa [#allocation6], 1
    %s822 = scalar_lea.sflag [#allocation6], 1
    %823 = vsyncpa %s822, 1
    %824 = vsyncpa [#allocation9], 1
    %825 = vsyncpa [#allocation12], 1
    %826 = vsyncpa [#allocation4], 1
    %s827 = scalar_lea.sflag [#allocation4], 1
    %828 = vsyncpa %s827, 1

</llo_original>
